<compile_context>
chip_gen: v5e
topology: v5e:2x2
jax: 0.10.0
libtpu: 0.0.40
codegen_flags: <defaults>
</compile_context>

<pallas_src>
import functools

import jax
import jax.numpy as jnp
from jax.experimental import pallas as pl
from jax.experimental.pallas import tpu as pltpu

_LANE = 128
_SUB = 16                        # bf16 sublane packing granularity (batch tile unit)
_VMEM_LIMIT = 32 * 1024 * 1024   # explicit scoped-VMEM limit; safe on v5e/v6e/v7x
_TILE_BUDGET = 24 * 1024 * 1024  # VMEM budget used to size the batch tile
_MAX_TB = 4096                   # cap on the batch tile


def _round_up(n, m):
    return ((n + m - 1) // m) * m


def _fcn_ae_kernel(x_ref,
                   w1_ref, b1_ref,
                   w2_ref, b2_ref,
                   w3_ref, b3_ref,
                   w4_ref, b4_ref,
                   o_ref):
    """Fused 4-layer MLP autoencoder forward for one batch tile.

    x_ref : (tb, D)    f32  (D = unpadded input_size; cast to bf16 in-kernel)
    w1    : (D,  Hp)   bf16   b1 : (1, Hp) f32
    w2    : (Hp, Ep)   bf16   b2 : (1, Ep) f32
    w3    : (Ep, Hp)   bf16   b3 : (1, Hp) f32
    w4    : (Hp, D)    bf16   b4 : (1, D)  f32
    o_ref : (tb, D)    bf16
    """
    # Cast to bf16 only for the MXU; elementwise math stays f32 (v5e-friendly).
    x = x_ref[...].astype(jnp.bfloat16)

    # Encoder: fc1 -> ReLU -> fc2 -> ReLU
    h1 = jnp.dot(x, w1_ref[...], preferred_element_type=jnp.float32) + b1_ref[...]
    h1 = jnp.maximum(h1, 0.0).astype(jnp.bfloat16)

    z = jnp.dot(h1, w2_ref[...], preferred_element_type=jnp.float32) + b2_ref[...]
    z = jnp.maximum(z, 0.0).astype(jnp.bfloat16)

    # Decoder: fc3 -> ReLU -> fc4 -> Sigmoid
    h3 = jnp.dot(z, w3_ref[...], preferred_element_type=jnp.float32) + b3_ref[...]
    h3 = jnp.maximum(h3, 0.0).astype(jnp.bfloat16)

    logits = jnp.dot(h3, w4_ref[...], preferred_element_type=jnp.float32) + b4_ref[...]
    o_ref[...] = jax.nn.sigmoid(logits).astype(o_ref.dtype)


@functools.partial(jax.jit, static_argnames=("out_dtype",))
def fcn_ae_forward(x, params, *, out_dtype=jnp.bfloat16):
    """Fused autoencoder forward via a single Pallas kernel.

    x      : [B, input_size] float32
    params : dict w1..w4 ([in, out]) and b1..b4 ([1, out]) float32
    returns: [B, input_size] `out_dtype` (bf16 by default; values match
             sigmoid(fc4(relu(fc3(relu(fc2(relu(fc1(x)))))))) with bf16-MXU /
             f32-accumulate numerics).
    """
    B, D = x.shape
    hidden = params["w1"].shape[1]
    embedding = params["w2"].shape[1]

    # Lane-dense padding of hidden / embedding dims only (exact through ReLU).
    Hp = _round_up(hidden, _LANE)
    Ep = _round_up(embedding, _LANE)

    weight_bytes = (2 * (D * Hp + Hp * Ep + Ep * Hp + Hp * D)
                    + 4 * (Hp + Ep + Hp + D))

    # ---- adaptive batch tiling -------------------------------------------
    Bp16 = _round_up(max(B, 1), _SUB)
    per_row_bytes = (
        2 * D * 4                  # x tile (f32), double-buffered
        + 2 * D * 2                # out tile (bf16), double-buffered
        + 4 * (2 * Hp + Ep)        # f32 intermediates h1, z, h3
        + 2 * (2 * Hp + Ep + D))   # bf16 copies fed to the MXU
    budget = max(_TILE_BUDGET - weight_bytes, 1 << 20)
    tb_max = max(_SUB, min(_MAX_TB, (budget // per_row_bytes) // _SUB * _SUB))

    if Bp16 <= _SUB:
        n_steps = 1                # nothing to split
    else:
        n_steps = max(2, -(-Bp16 // tb_max))   # ceil div
        n_steps += n_steps % 2                 # even -> both v7x TCs balanced
    tb = _round_up(-(-Bp16 // n_steps), _SUB)
    Bp = tb * n_steps

    # Pad only the batch rows, only when needed (no feature pad, no dtype cast).
    x_in = x if Bp == B else jnp.pad(x, ((0, Bp - B), (0, 0)))

    def pad2(a, rows, cols, dtype):
        a = a.astype(dtype)
        return jnp.pad(a, ((0, rows - a.shape[0]), (0, cols - a.shape[1])))

    w1 = pad2(params["w1"], D, Hp, jnp.bfloat16)
    b1 = pad2(params["b1"], 1, Hp, jnp.float32)
    w2 = pad2(params["w2"], Hp, Ep, jnp.bfloat16)
    b2 = pad2(params["b2"], 1, Ep, jnp.float32)
    w3 = pad2(params["w3"], Ep, Hp, jnp.bfloat16)
    b3 = pad2(params["b3"], 1, Hp, jnp.float32)
    w4 = pad2(params["w4"], Hp, D, jnp.bfloat16)
    b4 = pad2(params["b4"], 1, D, jnp.float32)

    # x / out tiled over batch; weights & biases fully resident in VMEM.
    x_spec = pl.BlockSpec((tb, D), lambda i: (i, 0))
    out_spec = pl.BlockSpec((tb, D), lambda i: (i, 0))
    vmem_full = pl.BlockSpec(memory_space=pltpu.MemorySpace.VMEM)
    in_specs = [x_spec] + [vmem_full] * 8

    # Advisory cost estimate from the shapes actually executed.
    out_itemsize = jnp.dtype(out_dtype).itemsize
    flops = 2 * Bp * (D * Hp + Hp * Ep + Ep * Hp + Hp * D)
    transcendentals = Bp * D                      # sigmoid
    bytes_accessed = Bp * D * 4 + Bp * D * out_itemsize + weight_bytes
    cost = pl.CostEstimate(flops=flops, transcendentals=transcendentals,
                           bytes_accessed=bytes_accessed)

    out = pl.pallas_call(
        _fcn_ae_kernel,
        out_shape=jax.ShapeDtypeStruct((Bp, D), out_dtype),
        grid_spec=pltpu.PrefetchScalarGridSpec(
            num_scalar_prefetch=0,
            grid=(n_steps,),
            in_specs=in_specs,
            out_specs=out_spec,
        ),
        compiler_params=pltpu.CompilerParams(
            dimension_semantics=("parallel",),
            vmem_limit_bytes=_VMEM_LIMIT,
        ),
        cost_estimate=cost,
    )(x_in, w1, b1, w2, b2, w3, b3, w4, b4)

    return out if Bp == B else out[:B]


def init_params(key, input_size, embedding_size, hidden_size, dtype=jnp.float32):
    """Deterministic init mimicking PyTorch nn.Linear default (U(+-1/sqrt(fan_in)))."""
    def linear(key, fan_in, fan_out):
        kw, kb = jax.random.split(key)
        bound = 1.0 / jnp.sqrt(fan_in)
        w = jax.random.uniform(kw, (fan_in, fan_out), dtype, -bound, bound)
        b = jax.random.uniform(kb, (1, fan_out), dtype, -bound, bound)
        return w, b

    k1, k2, k3, k4 = jax.random.split(key, 4)
    w1, b1 = linear(k1, input_size, hidden_size)       # fc1
    w2, b2 = linear(k2, hidden_size, embedding_size)   # fc2
    w3, b3 = linear(k3, embedding_size, hidden_size)   # fc3
    w4, b4 = linear(k4, hidden_size, input_size)       # fc4
    return dict(w1=w1, b1=b1, w2=w2, b2=b2, w3=w3, b3=b3, w4=w4, b4=b4)


def reference_forward_f32(x, p):
    """Pure-JAX f32 reference of the PyTorch forward (semantic check)."""
    h1 = jax.nn.relu(x @ p["w1"] + p["b1"])
    z = jax.nn.relu(h1 @ p["w2"] + p["b2"])
    h3 = jax.nn.relu(z @ p["w3"] + p["b3"])
    return jax.nn.sigmoid(h3 @ p["w4"] + p["b4"])


def reference_forward_bf16(x, p):
    """Reference with the kernel's bf16-matmul / f32-accumulate numerics."""
    bf = jnp.bfloat16

    def lin(a, w, b):
        return jnp.dot(a.astype(bf), w.astype(bf),
                       preferred_element_type=jnp.float32) + b.astype(jnp.float32)

    h1 = jnp.maximum(lin(x, p["w1"], p["b1"]), 0.0)
    z = jnp.maximum(lin(h1, p["w2"], p["b2"]), 0.0)
    h3 = jnp.maximum(lin(z, p["w3"], p["b3"]), 0.0)
    return jax.nn.sigmoid(lin(h3, p["w4"], p["b4"]))


if __name__ == "__main__":
    key = jax.random.PRNGKey(0)
    kx, kp = jax.random.split(key)

    # Small shapes consistent with the flattened-window autoencoder.
    batch = 128            # -> grid of 2 balanced "parallel" steps (both v7x TCs)
    input_size = 64        # flattened window fed to FC_Encoder
    embedding_size = 16
    hidden_size = 32       # run_config.fcn_hidden_size

    x = jax.random.normal(kx, (batch, input_size), dtype=jnp.float32)
    params = init_params(kp, input_size, embedding_size, hidden_size)

    out = fcn_ae_forward(x, params)
    out = jax.block_until_ready(out)

    assert out.shape == (batch, input_size)
    out_f32 = out.astype(jnp.float32)

    # Tight check against a reference with identical bf16-matmul numerics
    # (kernel additionally rounds the final sigmoid to bf16).
    ref_bf16 = reference_forward_bf16(x, params)
    assert jnp.allclose(out_f32, ref_bf16, atol=1e-2, rtol=1e-2), \
        "mismatch vs bf16-path reference"

    # Loose semantic check against the full-f32 PyTorch-equivalent forward.
    # NOTE: bf16 MXU inputs + bf16 output deviate from exact f32 parity by design.
    ref_f32 = reference_forward_f32(x, params)
    assert jnp.allclose(out_f32, ref_f32, atol=5e-2, rtol=5e-2), \
        "mismatch vs f32 reference"

    print("KERNEL_OK")
</pallas_src>

<mosaic_0001>
module attributes {stable_mosaic.version = 11 : i64} {
  func.func @_fcn_ae_kernel(%arg0: i32, %arg1: memref<64x64xf32, #tpu.memory_space<vmem>>, %arg2: memref<64x128xbf16, #tpu.memory_space<vmem>>, %arg3: memref<1x128xf32, #tpu.memory_space<vmem>>, %arg4: memref<128x128xbf16, #tpu.memory_space<vmem>>, %arg5: memref<1x128xf32, #tpu.memory_space<vmem>>, %arg6: memref<128x128xbf16, #tpu.memory_space<vmem>>, %arg7: memref<1x128xf32, #tpu.memory_space<vmem>>, %arg8: memref<128x64xbf16, #tpu.memory_space<vmem>>, %arg9: memref<1x64xf32, #tpu.memory_space<vmem>>, %arg10: memref<64x64xbf16, #tpu.memory_space<vmem>>) attributes {dimension_semantics = [#tpu.dimension_semantics<parallel>], iteration_bounds = array<i64: 2>, scalar_prefetch = 0 : i64, scratch_operands = 0 : i64, tpu.core_type = #tpu.core_type<tc>, window_params = [{transform_indices = @transform_0, window_bounds = array<i64: 64, 64>}, {pipeline_mode = #tpu.pipeline_mode<synchronous>, transform_indices = @transform_1, window_bounds = array<i64: 64, 128>}, {pipeline_mode = #tpu.pipeline_mode<synchronous>, transform_indices = @transform_2, window_bounds = array<i64: 1, 128>}, {pipeline_mode = #tpu.pipeline_mode<synchronous>, transform_indices = @transform_3, window_bounds = array<i64: 128, 128>}, {pipeline_mode = #tpu.pipeline_mode<synchronous>, transform_indices = @transform_4, window_bounds = array<i64: 1, 128>}, {pipeline_mode = #tpu.pipeline_mode<synchronous>, transform_indices = @transform_5, window_bounds = array<i64: 128, 128>}, {pipeline_mode = #tpu.pipeline_mode<synchronous>, transform_indices = @transform_6, window_bounds = array<i64: 1, 128>}, {pipeline_mode = #tpu.pipeline_mode<synchronous>, transform_indices = @transform_7, window_bounds = array<i64: 128, 64>}, {pipeline_mode = #tpu.pipeline_mode<synchronous>, transform_indices = @transform_8, window_bounds = array<i64: 1, 64>}, {transform_indices = @transform_9, window_bounds = array<i64: 64, 64>}]} {
    %c0 = arith.constant 0 : index
    %c0_0 = arith.constant 0 : index
    %0 = vector.load %arg1[%c0, %c0_0] : memref<64x64xf32, #tpu.memory_space<vmem>>, vector<64x64xf32>
    %1 = arith.truncf %0 : vector<64x64xf32> to vector<64x64xbf16>
    %c0_1 = arith.constant 0 : index
    %c0_2 = arith.constant 0 : index
    %2 = vector.load %arg2[%c0_1, %c0_2] : memref<64x128xbf16, #tpu.memory_space<vmem>>, vector<64x128xbf16>
    %cst = arith.constant dense<0.000000e+00> : vector<64x128xf32>
    %3 = tpu.matmul %1, %2, %cst {dimension_numbers = #tpu.dot_dimension_numbers<[1], [0], [0], [1], [0, 0, 1, 1], [], []>} : vector<64x64xbf16>, vector<64x128xbf16>, vector<64x128xf32> -> vector<64x128xf32>
    %c0_3 = arith.constant 0 : index
    %c0_4 = arith.constant 0 : index
    %4 = vector.load %arg3[%c0_3, %c0_4] : memref<1x128xf32, #tpu.memory_space<vmem>>, vector<1x128xf32>
    %5 = vector.broadcast %4 : vector<1x128xf32> to vector<64x128xf32>
    %6 = arith.addf %3, %5 : vector<64x128xf32>
    %cst_5 = arith.constant 0.000000e+00 : f32
    %7 = vector.broadcast %cst_5 : f32 to vector<64x128xf32>
    %8 = arith.maximumf %6, %7 : vector<64x128xf32>
    %9 = arith.truncf %8 : vector<64x128xf32> to vector<64x128xbf16>
    %c0_6 = arith.constant 0 : index
    %c0_7 = arith.constant 0 : index
    %10 = vector.load %arg4[%c0_6, %c0_7] : memref<128x128xbf16, #tpu.memory_space<vmem>>, vector<128x128xbf16>
    %cst_8 = arith.constant dense<0.000000e+00> : vector<64x128xf32>
    %11 = tpu.matmul %9, %10, %cst_8 {dimension_numbers = #tpu.dot_dimension_numbers<[1], [0], [0], [1], [0, 0, 1, 1], [], []>} : vector<64x128xbf16>, vector<128x128xbf16>, vector<64x128xf32> -> vector<64x128xf32>
    %c0_9 = arith.constant 0 : index
    %c0_10 = arith.constant 0 : index
    %12 = vector.load %arg5[%c0_9, %c0_10] : memref<1x128xf32, #tpu.memory_space<vmem>>, vector<1x128xf32>
    %13 = vector.broadcast %12 : vector<1x128xf32> to vector<64x128xf32>
    %14 = arith.addf %11, %13 : vector<64x128xf32>
    %cst_11 = arith.constant 0.000000e+00 : f32
    %15 = vector.broadcast %cst_11 : f32 to vector<64x128xf32>
    %16 = arith.maximumf %14, %15 : vector<64x128xf32>
    %17 = arith.truncf %16 : vector<64x128xf32> to vector<64x128xbf16>
    %c0_12 = arith.constant 0 : index
    %c0_13 = arith.constant 0 : index
    %18 = vector.load %arg6[%c0_12, %c0_13] : memref<128x128xbf16, #tpu.memory_space<vmem>>, vector<128x128xbf16>
    %cst_14 = arith.constant dense<0.000000e+00> : vector<64x128xf32>
    %19 = tpu.matmul %17, %18, %cst_14 {dimension_numbers = #tpu.dot_dimension_numbers<[1], [0], [0], [1], [0, 0, 1, 1], [], []>} : vector<64x128xbf16>, vector<128x128xbf16>, vector<64x128xf32> -> vector<64x128xf32>
    %c0_15 = arith.constant 0 : index
    %c0_16 = arith.constant 0 : index
    %20 = vector.load %arg7[%c0_15, %c0_16] : memref<1x128xf32, #tpu.memory_space<vmem>>, vector<1x128xf32>
    %21 = vector.broadcast %20 : vector<1x128xf32> to vector<64x128xf32>
    %22 = arith.addf %19, %21 : vector<64x128xf32>
    %cst_17 = arith.constant 0.000000e+00 : f32
    %23 = vector.broadcast %cst_17 : f32 to vector<64x128xf32>
    %24 = arith.maximumf %22, %23 : vector<64x128xf32>
    %25 = arith.truncf %24 : vector<64x128xf32> to vector<64x128xbf16>
    %c0_18 = arith.constant 0 : index
    %c0_19 = arith.constant 0 : index
    %26 = vector.load %arg8[%c0_18, %c0_19] : memref<128x64xbf16, #tpu.memory_space<vmem>>, vector<128x64xbf16>
    %cst_20 = arith.constant dense<0.000000e+00> : vector<64x64xf32>
    %27 = tpu.matmul %25, %26, %cst_20 {dimension_numbers = #tpu.dot_dimension_numbers<[1], [0], [0], [1], [0, 0, 1, 1], [], []>} : vector<64x128xbf16>, vector<128x64xbf16>, vector<64x64xf32> -> vector<64x64xf32>
    %c0_21 = arith.constant 0 : index
    %c0_22 = arith.constant 0 : index
    %28 = vector.load %arg9[%c0_21, %c0_22] : memref<1x64xf32, #tpu.memory_space<vmem>>, vector<1x64xf32>
    %29 = vector.broadcast %28 : vector<1x64xf32> to vector<64x64xf32>
    %30 = arith.addf %27, %29 : vector<64x64xf32>
    %31 = arith.negf %30 : vector<64x64xf32>
    %32 = math.exp %31 : vector<64x64xf32>
    %cst_23 = arith.constant 1.000000e+00 : f32
    %33 = vector.broadcast %cst_23 : f32 to vector<64x64xf32>
    %34 = arith.addf %33, %32 : vector<64x64xf32>
    %35 = arith.divf %33, %34 : vector<64x64xf32>
    %36 = arith.truncf %35 : vector<64x64xf32> to vector<64x64xbf16>
    %c0_24 = arith.constant 0 : index
    %c0_25 = arith.constant 0 : index
    %37 = vector.load %arg10[%c0_24, %c0_25] : memref<64x64xbf16, #tpu.memory_space<vmem>>, vector<64x64xbf16>
    tpu.vector_store %arg10[%c0_24, %c0_25], %36 {strides = array<i32>} : memref<64x64xbf16, #tpu.memory_space<vmem>>, vector<64x64xbf16>,
    return
  }
  func.func @transform_0(%arg0: i32) -> (i32, i32) {
    %c0_i32 = arith.constant 0 : i32
    %c0_i32_0 = arith.constant 0 : i32
    return %arg0, %c0_i32 : i32, i32
  }
  func.func @transform_1(%arg0: i32) -> (i32, i32) {
    %c0_i32 = arith.constant 0 : i32
    %c0_i32_0 = arith.constant 0 : i32
    %c0_i32_1 = arith.constant 0 : i32
    return %c0_i32, %c0_i32_0 : i32, i32
  }
  func.func @transform_2(%arg0: i32) -> (i32, i32) {
    %c0_i32 = arith.constant 0 : i32
    %c0_i32_0 = arith.constant 0 : i32
    %c0_i32_1 = arith.constant 0 : i32
    return %c0_i32, %c0_i32_0 : i32, i32
  }
  func.func @transform_3(%arg0: i32) -> (i32, i32) {
    %c0_i32 = arith.constant 0 : i32
    %c0_i32_0 = arith.constant 0 : i32
    %c0_i32_1 = arith.constant 0 : i32
    return %c0_i32, %c0_i32_0 : i32, i32
  }
  func.func @transform_4(%arg0: i32) -> (i32, i32) {
    %c0_i32 = arith.constant 0 : i32
    %c0_i32_0 = arith.constant 0 : i32
    %c0_i32_1 = arith.constant 0 : i32
    return %c0_i32, %c0_i32_0 : i32, i32
  }
  func.func @transform_5(%arg0: i32) -> (i32, i32) {
    %c0_i32 = arith.constant 0 : i32
    %c0_i32_0 = arith.constant 0 : i32
    %c0_i32_1 = arith.constant 0 : i32
    return %c0_i32, %c0_i32_0 : i32, i32
  }
  func.func @transform_6(%arg0: i32) -> (i32, i32) {
    %c0_i32 = arith.constant 0 : i32
    %c0_i32_0 = arith.constant 0 : i32
    %c0_i32_1 = arith.constant 0 : i32
    return %c0_i32, %c0_i32_0 : i32, i32
  }
  func.func @transform_7(%arg0: i32) -> (i32, i32) {
    %c0_i32 = arith.constant 0 : i32
    %c0_i32_0 = arith.constant 0 : i32
    %c0_i32_1 = arith.constant 0 : i32
    return %c0_i32, %c0_i32_0 : i32, i32
  }
  func.func @transform_8(%arg0: i32) -> (i32, i32) {
    %c0_i32 = arith.constant 0 : i32
    %c0_i32_0 = arith.constant 0 : i32
    %c0_i32_1 = arith.constant 0 : i32
    return %c0_i32, %c0_i32_0 : i32, i32
  }
  func.func @transform_9(%arg0: i32) -> (i32, i32) {
    %c0_i32 = arith.constant 0 : i32
    %c0_i32_0 = arith.constant 0 : i32
    return %arg0, %c0_i32 : i32, i32
  }
}

</mosaic_0001>

<llo_original>
// kernel: fcn_ae_forward.1
$region0: #{fcn_ae_forward.1}
  #allocation0 [shape = 'u32[]', space=smem, size = 0x4, offset = 0x4, fixed_abs, tag = 'smem constant byte address 0x4 - core index']
  #allocation1 [shape = 'u32[72,128]{1,0:T(1,128)}', space=vmem, size = 0x9000, scoped, tag = 'internal scratch']
  %s0 = inlined_call_operand.vmem [shape: f32[128,64], index: 0, kind: input, shape index: {}]
  %s1 = inlined_call_operand.vmem [shape: bf16[64,128], index: 1, kind: input, shape index: {}]
  %s2 = inlined_call_operand.vmem [shape: f32[1,128], index: 2, kind: input, shape index: {}]
  %s3 = inlined_call_operand.vmem [shape: bf16[128,128], index: 3, kind: input, shape index: {}]
  %s4 = inlined_call_operand.vmem [shape: f32[1,128], index: 4, kind: input, shape index: {}]
  %s5 = inlined_call_operand.vmem [shape: bf16[128,128], index: 5, kind: input, shape index: {}]
  %s6 = inlined_call_operand.vmem [shape: f32[1,128], index: 6, kind: input, shape index: {}]
  %s7 = inlined_call_operand.vmem [shape: bf16[128,64], index: 7, kind: input, shape index: {}]
  %s8 = inlined_call_operand.vmem [shape: f32[1,64], index: 8, kind: input, shape index: {}]
  %s9 = inlined_call_operand.vmem [shape: bf16[128,64], index: 9, kind: output, shape index: {}]
  %s10 = sld [smem:[#allocation0]]
  $region69: #{fcn_ae_forward.1} parent=0
    _
  %s12 = ssub.s32 1, %s10
  %s13 = scalar_select 0, %s12, %s10
  loop: start=0, step=1, limit=4
  $region2: #{fcn_ae_forward.1} parent=0 // loop_pre_header
    _
  $region3: #{fcn_ae_forward.1} parent=0 // loop_header
    %s15 = sphi 0, %s19
    %p16 = scmp.ge.s32.totalorder %s15, 4
    %s25 = sphi 0, %s27
    %s28 = sphi 0, %s25
    %s29 = sphi 0, %s28
    %s45 = sphi 0, %s29
    %s49 = sphi 0, %s49
    %s51 = sphi 0, %s49
    %s52 = sphi 0, %s51
    %s66 = sphi 0, %s52
    %s70 = sphi 0, %s70
    %s72 = sphi 0, %s70
    %s73 = sphi 0, %s72
    %s87 = sphi 0, %s73
    %s91 = sphi 0, %s91
    %s93 = sphi 0, %s91
    %s94 = sphi 0, %s93
    %s108 = sphi 0, %s94
    %s112 = sphi 0, %s112
    %s114 = sphi 0, %s112
    %s115 = sphi 0, %s114
    %s129 = sphi 0, %s115
    %s133 = sphi 0, %s133
    %s135 = sphi 0, %s133
    %s136 = sphi 0, %s135
    %s150 = sphi 0, %s136
    %s154 = sphi 0, %s154
    %s156 = sphi 0, %s154
    %s157 = sphi 0, %s156
    %s171 = sphi 0, %s157
    %s175 = sphi 0, %s175
    %s177 = sphi 0, %s175
    %s178 = sphi 0, %s177
    %s192 = sphi 0, %s178
    %s196 = sphi 0, %s196
    %s198 = sphi 0, %s196
    %s199 = sphi 0, %s198
    %s213 = sphi 0, %s199
    %s219 = sphi 0, %s221
    %s222 = sphi 0, %s219
    %s223 = sphi 0, %s222
    %s239 = sphi 0, %s223
  $region4: #{fcn_ae_forward.1} parent=0 // loop_header_branch
    %18 = sbr.rel (%p16) target = $region8
  $region5: #{fcn_ae_forward.1} parent=0 // loop_body
    %s20 = ssub.s32 %s15, 1
    %s21 = ssub.s32 %s15, 2
    %s22 = sadd.s32 %s15, 1
    %s23 = ssub.s32 %s15, %s22
    %p24 = scmp.eq.s32.totalorder %s23, 0
    %s26 = sadd.s32 %s25, 1
    %s27 = scalar_select %p24, %s25, %s26
    %p30 = pneg %p24
    %p31 = scmp.eq.s32.totalorder %s15, 1
    %p32 = por %p30, %p31
    %p33 = scmp.ne.s32.totalorder %s25, %s28
    %p34 = scmp.eq.s32.totalorder %s15, 0
    %p35 = por %p33, %p34
    %p36 = scmp.ne.s32.totalorder %s25, %s28
    %p37 = scmp.eq.s32.totalorder %s20, 1
    %p38 = por %p36, %p37
    %p39 = scmp.ne.s32.totalorder %s28, %s29
    %p40 = scmp.eq.s32.totalorder %s20, 0
    %p41 = por %p39, %p40
    %p42 = scmp.ne.s32.totalorder %s28, %s29
    %p43 = scmp.eq.s32.totalorder %s21, 1
    %p44 = por %p42, %p43
    %p46 = scmp.ne.s32.totalorder %s29, %s45
    %p47 = scmp.eq.s32.totalorder %s21, 0
    %p48 = por %p46, %p47
    %s50 = sadd.s32 %s49, 1
    %p53 = scmp.eq.s32.totalorder %s15, 1
    %p54 = scmp.ne.s32.totalorder %s49, %s51
    %p55 = scmp.eq.s32.totalorder %s15, 0
    %p56 = por %p54, %p55
    %p57 = scmp.ne.s32.totalorder %s49, %s51
    %p58 = scmp.eq.s32.totalorder %s20, 1
    %p59 = por %p57, %p58
    %p60 = scmp.ne.s32.totalorder %s51, %s52
    %p61 = scmp.eq.s32.totalorder %s20, 0
    %p62 = por %p60, %p61
    %p63 = scmp.ne.s32.totalorder %s51, %s52
    %p64 = scmp.eq.s32.totalorder %s21, 1
    %p65 = por %p63, %p64
    %p67 = scmp.ne.s32.totalorder %s52, %s66
    %p68 = scmp.eq.s32.totalorder %s21, 0
    %p69 = por %p67, %p68
    %s71 = sadd.s32 %s70, 1
    %p74 = scmp.eq.s32.totalorder %s15, 1
    %p75 = scmp.ne.s32.totalorder %s70, %s72
    %p76 = scmp.eq.s32.totalorder %s15, 0
    %p77 = por %p75, %p76
    %p78 = scmp.ne.s32.totalorder %s70, %s72
    %p79 = scmp.eq.s32.totalorder %s20, 1
    %p80 = por %p78, %p79
    %p81 = scmp.ne.s32.totalorder %s72, %s73
    %p82 = scmp.eq.s32.totalorder %s20, 0
    %p83 = por %p81, %p82
    %p84 = scmp.ne.s32.totalorder %s72, %s73
    %p85 = scmp.eq.s32.totalorder %s21, 1
    %p86 = por %p84, %p85
    %p88 = scmp.ne.s32.totalorder %s73, %s87
    %p89 = scmp.eq.s32.totalorder %s21, 0
    %p90 = por %p88, %p89
    %s92 = sadd.s32 %s91, 1
    %p95 = scmp.eq.s32.totalorder %s15, 1
    %p96 = scmp.ne.s32.totalorder %s91, %s93
    %p97 = scmp.eq.s32.totalorder %s15, 0
    %p98 = por %p96, %p97
    %p99 = scmp.ne.s32.totalorder %s91, %s93
    %p100 = scmp.eq.s32.totalorder %s20, 1
    %p101 = por %p99, %p100
    %p102 = scmp.ne.s32.totalorder %s93, %s94
    %p103 = scmp.eq.s32.totalorder %s20, 0
    %p104 = por %p102, %p103
    %p105 = scmp.ne.s32.totalorder %s93, %s94
    %p106 = scmp.eq.s32.totalorder %s21, 1
    %p107 = por %p105, %p106
    %p109 = scmp.ne.s32.totalorder %s94, %s108
    %p110 = scmp.eq.s32.totalorder %s21, 0
    %p111 = por %p109, %p110
    %s113 = sadd.s32 %s112, 1
    %p116 = scmp.eq.s32.totalorder %s15, 1
    %p117 = scmp.ne.s32.totalorder %s112, %s114
    %p118 = scmp.eq.s32.totalorder %s15, 0
    %p119 = por %p117, %p118
    %p120 = scmp.ne.s32.totalorder %s112, %s114
    %p121 = scmp.eq.s32.totalorder %s20, 1
    %p122 = por %p120, %p121
    %p123 = scmp.ne.s32.totalorder %s114, %s115
    %p124 = scmp.eq.s32.totalorder %s20, 0
    %p125 = por %p123, %p124
    %p126 = scmp.ne.s32.totalorder %s114, %s115
    %p127 = scmp.eq.s32.totalorder %s21, 1
    %p128 = por %p126, %p127
    %p130 = scmp.ne.s32.totalorder %s115, %s129
    %p131 = scmp.eq.s32.totalorder %s21, 0
    %p132 = por %p130, %p131
    %s134 = sadd.s32 %s133, 1
    %p137 = scmp.eq.s32.totalorder %s15, 1
    %p138 = scmp.ne.s32.totalorder %s133, %s135
    %p139 = scmp.eq.s32.totalorder %s15, 0
    %p140 = por %p138, %p139
    %p141 = scmp.ne.s32.totalorder %s133, %s135
    %p142 = scmp.eq.s32.totalorder %s20, 1
    %p143 = por %p141, %p142
    %p144 = scmp.ne.s32.totalorder %s135, %s136
    %p145 = scmp.eq.s32.totalorder %s20, 0
    %p146 = por %p144, %p145
    %p147 = scmp.ne.s32.totalorder %s135, %s136
    %p148 = scmp.eq.s32.totalorder %s21, 1
    %p149 = por %p147, %p148
    %p151 = scmp.ne.s32.totalorder %s136, %s150
    %p152 = scmp.eq.s32.totalorder %s21, 0
    %p153 = por %p151, %p152
    %s155 = sadd.s32 %s154, 1
    %p158 = scmp.eq.s32.totalorder %s15, 1
    %p159 = scmp.ne.s32.totalorder %s154, %s156
    %p160 = scmp.eq.s32.totalorder %s15, 0
    %p161 = por %p159, %p160
    %p162 = scmp.ne.s32.totalorder %s154, %s156
    %p163 = scmp.eq.s32.totalorder %s20, 1
    %p164 = por %p162, %p163
    %p165 = scmp.ne.s32.totalorder %s156, %s157
    %p166 = scmp.eq.s32.totalorder %s20, 0
    %p167 = por %p165, %p166
    %p168 = scmp.ne.s32.totalorder %s156, %s157
    %p169 = scmp.eq.s32.totalorder %s21, 1
    %p170 = por %p168, %p169
    %p172 = scmp.ne.s32.totalorder %s157, %s171
    %p173 = scmp.eq.s32.totalorder %s21, 0
    %p174 = por %p172, %p173
    %s176 = sadd.s32 %s175, 1
    %p179 = scmp.eq.s32.totalorder %s15, 1
    %p180 = scmp.ne.s32.totalorder %s175, %s177
    %p181 = scmp.eq.s32.totalorder %s15, 0
    %p182 = por %p180, %p181
    %p183 = scmp.ne.s32.totalorder %s175, %s177
    %p184 = scmp.eq.s32.totalorder %s20, 1
    %p185 = por %p183, %p184
    %p186 = scmp.ne.s32.totalorder %s177, %s178
    %p187 = scmp.eq.s32.totalorder %s20, 0
    %p188 = por %p186, %p187
    %p189 = scmp.ne.s32.totalorder %s177, %s178
    %p190 = scmp.eq.s32.totalorder %s21, 1
    %p191 = por %p189, %p190
    %p193 = scmp.ne.s32.totalorder %s178, %s192
    %p194 = scmp.eq.s32.totalorder %s21, 0
    %p195 = por %p193, %p194
    %s197 = sadd.s32 %s196, 1
    %p200 = scmp.eq.s32.totalorder %s15, 1
    %p201 = scmp.ne.s32.totalorder %s196, %s198
    %p202 = scmp.eq.s32.totalorder %s15, 0
    %p203 = por %p201, %p202
    %p204 = scmp.ne.s32.totalorder %s196, %s198
    %p205 = scmp.eq.s32.totalorder %s20, 1
    %p206 = por %p204, %p205
    %p207 = scmp.ne.s32.totalorder %s198, %s199
    %p208 = scmp.eq.s32.totalorder %s20, 0
    %p209 = por %p207, %p208
    %p210 = scmp.ne.s32.totalorder %s198, %s199
    %p211 = scmp.eq.s32.totalorder %s21, 1
    %p212 = por %p210, %p211
    %p214 = scmp.ne.s32.totalorder %s199, %s213
    %p215 = scmp.eq.s32.totalorder %s21, 0
    %p216 = por %p214, %p215
    %s217 = ssub.s32 %s15, %s22
    %p218 = scmp.eq.s32.totalorder %s217, 0
    %s220 = sadd.s32 %s219, 1
    %s221 = scalar_select %p218, %s219, %s220
    %p224 = pneg %p218
    %p225 = scmp.eq.s32.totalorder %s15, 1
    %p226 = por %p224, %p225
    %p227 = scmp.ne.s32.totalorder %s219, %s222
    %p228 = scmp.eq.s32.totalorder %s15, 0
    %p229 = por %p227, %p228
    %p230 = scmp.ne.s32.totalorder %s219, %s222
    %p231 = scmp.eq.s32.totalorder %s20, 1
    %p232 = por %p230, %p231
    %p233 = scmp.ne.s32.totalorder %s222, %s223
    %p234 = scmp.eq.s32.totalorder %s20, 0
    %p235 = por %p233, %p234
    %p236 = scmp.ne.s32.totalorder %s222, %s223
    %p237 = scmp.eq.s32.totalorder %s21, 1
    %p238 = por %p236, %p237
    %p240 = scmp.ne.s32.totalorder %s223, %s239
    %p241 = scmp.eq.s32.totalorder %s21, 0
    %p242 = por %p240, %p241
    %p243 = scmp.le.s32.totalorder 1, %s15
    %p244 = scmp.lt.s32.totalorder %s15, 3
    %p245 = pnand %p243, %p244
    %p246 = pneg %p245
    // Predicated region
    $region9: #{fcn_ae_forward.1} parent=5 // pred_check
      _
    $region10: #{fcn_ae_forward.1} parent=5 // pred_check_branch
      %248 = sbr.rel (%p245) target = $region12
    $region11: #{fcn_ae_forward.1} parent=5 // pred_region
      %s249 = ssub.s32 %s15, 1
      // Predicated region
      $region13: #{fcn_ae_forward.1} parent=11 // pred_check
        %p250 = pneg %p62
      $region14: #{fcn_ae_forward.1} parent=11 // pred_check_branch
        %252 = sbr.rel (%p250) target = $region16
      $region15: #{fcn_ae_forward.1} parent=11 // pred_region
        _
      $region16: #{fcn_ae_forward.1} parent=11 // pred_fallthru
        _
      // Predicated region
      $region17: #{fcn_ae_forward.1} parent=11 // pred_check
        %p253 = pneg %p83
      $region18: #{fcn_ae_forward.1} parent=11 // pred_check_branch
        %255 = sbr.rel (%p253) target = $region20
      $region19: #{fcn_ae_forward.1} parent=11 // pred_region
        _
      $region20: #{fcn_ae_forward.1} parent=11 // pred_fallthru
        _
      // Predicated region
      $region21: #{fcn_ae_forward.1} parent=11 // pred_check
        %p256 = pneg %p104
      $region22: #{fcn_ae_forward.1} parent=11 // pred_check_branch
        %258 = sbr.rel (%p256) target = $region24
      $region23: #{fcn_ae_forward.1} parent=11 // pred_region
        _
      $region24: #{fcn_ae_forward.1} parent=11 // pred_fallthru
        _
      // Predicated region
      $region25: #{fcn_ae_forward.1} parent=11 // pred_check
        %p259 = pneg %p125
      $region26: #{fcn_ae_forward.1} parent=11 // pred_check_branch
        %261 = sbr.rel (%p259) target = $region28
      $region27: #{fcn_ae_forward.1} parent=11 // pred_region
        _
      $region28: #{fcn_ae_forward.1} parent=11 // pred_fallthru
        _
      // Predicated region
      $region29: #{fcn_ae_forward.1} parent=11 // pred_check
        %p262 = pneg %p146
      $region30: #{fcn_ae_forward.1} parent=11 // pred_check_branch
        %264 = sbr.rel (%p262) target = $region32
      $region31: #{fcn_ae_forward.1} parent=11 // pred_region
        _
      $region32: #{fcn_ae_forward.1} parent=11 // pred_fallthru
        _
      // Predicated region
      $region33: #{fcn_ae_forward.1} parent=11 // pred_check
        %p265 = pneg %p167
      $region34: #{fcn_ae_forward.1} parent=11 // pred_check_branch
        %267 = sbr.rel (%p265) target = $region36
      $region35: #{fcn_ae_forward.1} parent=11 // pred_region
        _
      $region36: #{fcn_ae_forward.1} parent=11 // pred_fallthru
        _
      // Predicated region
      $region37: #{fcn_ae_forward.1} parent=11 // pred_check
        %p268 = pneg %p188
      $region38: #{fcn_ae_forward.1} parent=11 // pred_check_branch
        %270 = sbr.rel (%p268) target = $region40
      $region39: #{fcn_ae_forward.1} parent=11 // pred_region
        _
      $region40: #{fcn_ae_forward.1} parent=11 // pred_fallthru
        _
      // Predicated region
      $region41: #{fcn_ae_forward.1} parent=11 // pred_check
        %p271 = pneg %p209
      $region42: #{fcn_ae_forward.1} parent=11 // pred_check_branch
        %273 = sbr.rel (%p271) target = $region44
      $region43: #{fcn_ae_forward.1} parent=11 // pred_region
        _
      $region44: #{fcn_ae_forward.1} parent=11 // pred_fallthru
        _
    $region12: #{fcn_ae_forward.1} parent=5 // pred_fallthru
      _
    %p274 = scmp.lt.s32.totalorder %s15, 2
    // Predicated region
    $region45: #{fcn_ae_forward.1} parent=5 // pred_check
      %p275 = pneg %p274
    $region46: #{fcn_ae_forward.1} parent=5 // pred_check_branch
      %277 = sbr.rel (%p275) target = $region48
    $region47: #{fcn_ae_forward.1} parent=5 // pred_region
      // Predicated region
      $region49: #{fcn_ae_forward.1} parent=47 // pred_check
        %p278 = pneg %p35
      $region50: #{fcn_ae_forward.1} parent=47 // pred_check_branch
        %280 = sbr.rel (%p278) target = $region52
      $region51: #{fcn_ae_forward.1} parent=47 // pred_region
        %s281 = smul.u32 8, %s15
        %p282 = scmp.lt.s32.totalorder %s281, 15
        %s283 = scalar_select %p282, %s281, 15
        %s284 = smul.addr %s283, 8
        %s285 = scalar_lea.vmem %s0, %s284
        %s286 = smul.u32 8, %s15
      $region52: #{fcn_ae_forward.1} parent=47 // pred_fallthru
        _
    $region48: #{fcn_ae_forward.1} parent=5 // pred_fallthru
      _
    %p287 = scmp.le.s32.totalorder 1, %s15
    %p288 = scmp.lt.s32.totalorder %s15, 3
    %p289 = pnand %p287, %p288
    %p290 = pneg %p289
    // Predicated region
    $region53: #{fcn_ae_forward.1} parent=5 // pred_check
      _
    $region54: #{fcn_ae_forward.1} parent=5 // pred_check_branch
      %292 = sbr.rel (%p289) target = $region56
    $region55: #{fcn_ae_forward.1} parent=5 // pred_region
      %s293 = ssub.s32 %s15, 1
      %s294 = smul.u32 8, %s20
      %p295 = scmp.lt.s32.totalorder %s294, 15
      %s296 = scalar_select %p295, %s294, 15
      %s297 = smul.addr %s296, 8
      %s298 = scalar_lea.vmem %s0, %s297
      %p299 = pneg %p41
      %p300 = pneg %p38
      %p301 = pneg %p62
      %p302 = pneg %p59
      %p303 = pneg %p83
      %p304 = pneg %p80
      %p305 = pneg %p104
      %p306 = pneg %p101
      %p307 = pneg %p125
      %p308 = pneg %p122
      %p309 = pneg %p146
      %p310 = pneg %p143
      %p311 = pneg %p167
      %p312 = pneg %p164
      %p313 = pneg %p188
      %p314 = pneg %p185
      %p315 = pneg %p209
      %p316 = pneg %p206
      %p317 = pneg %p235
      %p318 = pneg %p232
      %s319 = smul.u32 8, %s20
      %p320 = scmp.lt.s32.totalorder %s319, 15
      %s321 = scalar_select %p320, %s319, 15
      %s322 = smul.addr %s321, 4
      %s323 = scalar_lea.vmem %s9, %s322
      %s324 = smul.u32 8, %s20
      %p325 = scmp.lt.s32.totalorder %s324, 15
      %s326 = scalar_select %p325, %s324, 15
      %s327 = smul.addr %s326, 8
      %s328 = scalar_lea.vmem %s0, %s327
      %s329 = smul.u32 8, %s20
      %s330 = smul.u32 8, %s20
      %p331 = scmp.lt.s32.totalorder %s330, 15
      %s332 = scalar_select %p331, %s330, 15
      %s333 = smul.addr %s332, 4
      %s334 = scalar_lea.vmem %s9, %s333
      %s335 = smul.u32 8, %s20
      %v337 = vld [vmem:[%s328] sm:$0xff]
      %v338 = vld [vmem:[%s328 + $0x8] sm:$0xff]
      %v339 = vld [vmem:[%s328 + $0x10] sm:$0xff]
      %v340 = vld [vmem:[%s328 + $0x18] sm:$0xff]
      %v341 = vld [vmem:[%s328 + $0x20] sm:$0xff]
      %v342 = vld [vmem:[%s328 + $0x28] sm:$0xff]
      %v343 = vld [vmem:[%s328 + $0x30] sm:$0xff]
      %v344 = vld [vmem:[%s328 + $0x38] sm:$0xff]
      %v345 = vpack.c.bf16 %v338, %v337
      %v346 = vpack.c.bf16 %v340, %v339
      %v347 = vpack.c.bf16 %v342, %v341
      %v348 = vpack.c.bf16 %v344, %v343
      %v349 = vld [vmem:[%s1] sm:$0xf]
      %v350 = vld [vmem:[%s1 + $0x4] sm:$0xf]
      %v351 = vld [vmem:[%s1 + $0x8] sm:$0xf]
      %v352 = vld [vmem:[%s1 + $0xc] sm:$0xf]
      %v353 = vld [vmem:[%s1 + $0x10] sm:$0xf]
      %v354 = vld [vmem:[%s1 + $0x14] sm:$0xf]
      %v355 = vld [vmem:[%s1 + $0x18] sm:$0xf]
      %v356 = vld [vmem:[%s1 + $0x1c] sm:$0xf]
      %v357 = vld [vmem:[%s2] sm:$0x1]
      %v359 = vperm.slane %v357, 0
      %v369 = vunpack.c.l.b16 %v349
      %v370 = vunpack.c.l.b16 %v350
      %v371 = vunpack.c.l.b16 %v351
      %v372 = vunpack.c.l.b16 %v352
      %v373 = vunpack.c.l.b16 %v353
      %v374 = vunpack.c.l.b16 %v354
      %v375 = vunpack.c.l.b16 %v355
      %v376 = vunpack.c.l.b16 %v356
      %v377 = vpack.c.b16 %v370, %v369
      %v378 = vpack.c.b16 %v372, %v371
      %v379 = vpack.c.b16 %v374, %v373
      %v380 = vpack.c.b16 %v376, %v375
      %vm385 = vcmask 523264
      %v387 = vsel %vm385, %v345, 0
      %v390 = vsel %vm385, %v346, 0
      %v393 = vsel %vm385, %v347, 0
      %v396 = vsel %vm385, %v348, 0
      %398 = vmatpush.bf16.msra.mxu0 0
      %399 = vmatpush.bf16.msra.mxu0 0
      %400 = vmatpush.bf16.msra.mxu0 0
      %401 = vmatpush.bf16.msra.mxu0 0
      %402 = vmatpush.bf16.msra.mxu0 %v380
      %403 = vmatpush.bf16.msra.mxu0 %v379
      %404 = vmatpush.bf16.msra.mxu0 %v378
      %405 = vmatpush.bf16.msra.mxu0 %v377
      %406 = vmatmul.bf16.gmra.mxu0 %v387
      %v407 = vpop.f32.mrf.mxu0
      %v408 = vadd.f32 %v359, %v407
      %v409 = vpop.f32.mrf.mxu0
      %v410 = vadd.f32 %v359, %v409
      %411 = vmatmul.bf16.gmra.mxu0 %v390
      %v412 = vpop.f32.mrf.mxu0
      %v413 = vadd.f32 %v359, %v412
      %v414 = vpop.f32.mrf.mxu0
      %v415 = vadd.f32 %v359, %v414
      %416 = vmatmul.bf16.gmra.mxu0 %v393
      %v417 = vpop.f32.mrf.mxu0
      %v418 = vadd.f32 %v359, %v417
      %v419 = vpop.f32.mrf.mxu0
      %v420 = vadd.f32 %v359, %v419
      %421 = vmatmul.bf16.gmra.mxu0 %v396
      %v422 = vpop.f32.mrf.mxu0
      %v423 = vadd.f32 %v359, %v422
      %v424 = vpop.f32.mrf.mxu0
      %v425 = vadd.f32 %v359, %v424
      %426 = vdwg.mxu0
      %v427 = vmax.f32 %v408, 0.0
      %v428 = vmax.f32 %v410, 0.0
      %v429 = vmax.f32 %v413, 0.0
      %v430 = vmax.f32 %v415, 0.0
      %v431 = vmax.f32 %v418, 0.0
      %v432 = vmax.f32 %v420, 0.0
      %v433 = vmax.f32 %v423, 0.0
      %v434 = vmax.f32 %v425, 0.0
      %v435 = vpack.c.bf16 %v428, %v427
      %v436 = vpack.c.bf16 %v430, %v429
      %v437 = vpack.c.bf16 %v432, %v431
      %v438 = vpack.c.bf16 %v434, %v433
      %v439 = vld [vmem:[%s3] sm:$0xf]
      %v440 = vld [vmem:[%s3 + $0x4] sm:$0xf]
      %v441 = vld [vmem:[%s3 + $0x8] sm:$0xf]
      %v442 = vld [vmem:[%s3 + $0xc] sm:$0xf]
      %v443 = vld [vmem:[%s3 + $0x10] sm:$0xf]
      %v444 = vld [vmem:[%s3 + $0x14] sm:$0xf]
      %v445 = vld [vmem:[%s3 + $0x18] sm:$0xf]
      %v446 = vld [vmem:[%s3 + $0x1c] sm:$0xf]
      %v447 = vld [vmem:[%s3 + $0x20] sm:$0xf]
      %v448 = vld [vmem:[%s3 + $0x24] sm:$0xf]
      %v449 = vld [vmem:[%s3 + $0x28] sm:$0xf]
      %v450 = vld [vmem:[%s3 + $0x2c] sm:$0xf]
      %v451 = vld [vmem:[%s3 + $0x30] sm:$0xf]
      %v452 = vld [vmem:[%s3 + $0x34] sm:$0xf]
      %v453 = vld [vmem:[%s3 + $0x38] sm:$0xf]
      %v454 = vld [vmem:[%s3 + $0x3c] sm:$0xf]
      %v455 = vld [vmem:[%s4] sm:$0x1]
      %v457 = vperm.slane %v455, 0
      %v475 = vunpack.c.l.b16 %v439
      %v476 = vunpack.c.l.b16 %v440
      %v477 = vunpack.c.l.b16 %v441
      %v478 = vunpack.c.l.b16 %v442
      %v479 = vunpack.c.l.b16 %v443
      %v480 = vunpack.c.l.b16 %v444
      %v481 = vunpack.c.l.b16 %v445
      %v482 = vunpack.c.l.b16 %v446
      %v483 = vunpack.c.l.b16 %v447
      %v484 = vunpack.c.l.b16 %v448
      %v485 = vunpack.c.l.b16 %v449
      %v486 = vunpack.c.l.b16 %v450
      %v487 = vunpack.c.l.b16 %v451
      %v488 = vunpack.c.l.b16 %v452
      %v489 = vunpack.c.l.b16 %v453
      %v490 = vunpack.c.l.b16 %v454
      %v491 = vpack.c.b16 %v476, %v475
      %v492 = vpack.c.b16 %v478, %v477
      %v493 = vpack.c.b16 %v480, %v479
      %v494 = vpack.c.b16 %v482, %v481
      %v495 = vpack.c.b16 %v484, %v483
      %v496 = vpack.c.b16 %v486, %v485
      %v497 = vpack.c.b16 %v488, %v487
      %v498 = vpack.c.b16 %v490, %v489
      %507 = vmatpush.bf16.msra.mxu0 %v498
      %508 = vmatpush.bf16.msra.mxu0 %v497
      %509 = vmatpush.bf16.msra.mxu0 %v496
      %510 = vmatpush.bf16.msra.mxu0 %v495
      %511 = vmatpush.bf16.msra.mxu0 %v494
      %512 = vmatpush.bf16.msra.mxu0 %v493
      %513 = vmatpush.bf16.msra.mxu0 %v492
      %514 = vmatpush.bf16.msra.mxu0 %v491
      %515 = vmatmul.bf16.gmra.mxu0 %v435
      %v516 = vpop.f32.mrf.mxu0
      %v517 = vadd.f32 %v457, %v516
      %v518 = vpop.f32.mrf.mxu0
      %v519 = vadd.f32 %v457, %v518
      %520 = vmatmul.bf16.gmra.mxu0 %v436
      %v521 = vpop.f32.mrf.mxu0
      %v522 = vadd.f32 %v457, %v521
      %v523 = vpop.f32.mrf.mxu0
      %v524 = vadd.f32 %v457, %v523
      %525 = vmatmul.bf16.gmra.mxu0 %v437
      %v526 = vpop.f32.mrf.mxu0
      %v527 = vadd.f32 %v457, %v526
      %v528 = vpop.f32.mrf.mxu0
      %v529 = vadd.f32 %v457, %v528
      %530 = vmatmul.bf16.gmra.mxu0 %v438
      %v531 = vpop.f32.mrf.mxu0
      %v532 = vadd.f32 %v457, %v531
      %v533 = vpop.f32.mrf.mxu0
      %v534 = vadd.f32 %v457, %v533
      %535 = vdwg.mxu0
      %v536 = vmax.f32 %v517, 0.0
      %v537 = vmax.f32 %v519, 0.0
      %v538 = vmax.f32 %v522, 0.0
      %v539 = vmax.f32 %v524, 0.0
      %v540 = vmax.f32 %v527, 0.0
      %v541 = vmax.f32 %v529, 0.0
      %v542 = vmax.f32 %v532, 0.0
      %v543 = vmax.f32 %v534, 0.0
      %v544 = vpack.c.bf16 %v537, %v536
      %v545 = vpack.c.bf16 %v539, %v538
      %v546 = vpack.c.bf16 %v541, %v540
      %v547 = vpack.c.bf16 %v543, %v542
      %v548 = vld [vmem:[%s5] sm:$0xf]
      %v549 = vld [vmem:[%s5 + $0x4] sm:$0xf]
      %v550 = vld [vmem:[%s5 + $0x8] sm:$0xf]
      %v551 = vld [vmem:[%s5 + $0xc] sm:$0xf]
      %v552 = vld [vmem:[%s5 + $0x10] sm:$0xf]
      %v553 = vld [vmem:[%s5 + $0x14] sm:$0xf]
      %v554 = vld [vmem:[%s5 + $0x18] sm:$0xf]
      %v555 = vld [vmem:[%s5 + $0x1c] sm:$0xf]
      %v556 = vld [vmem:[%s5 + $0x20] sm:$0xf]
      %v557 = vld [vmem:[%s5 + $0x24] sm:$0xf]
      %v558 = vld [vmem:[%s5 + $0x28] sm:$0xf]
      %v559 = vld [vmem:[%s5 + $0x2c] sm:$0xf]
      %v560 = vld [vmem:[%s5 + $0x30] sm:$0xf]
      %v561 = vld [vmem:[%s5 + $0x34] sm:$0xf]
      %v562 = vld [vmem:[%s5 + $0x38] sm:$0xf]
      %v563 = vld [vmem:[%s5 + $0x3c] sm:$0xf]
      %v564 = vld [vmem:[%s6] sm:$0x1]
      %v566 = vperm.slane %v564, 0
      %v584 = vunpack.c.l.b16 %v548
      %v585 = vunpack.c.l.b16 %v549
      %v586 = vunpack.c.l.b16 %v550
      %v587 = vunpack.c.l.b16 %v551
      %v588 = vunpack.c.l.b16 %v552
      %v589 = vunpack.c.l.b16 %v553
      %v590 = vunpack.c.l.b16 %v554
      %v591 = vunpack.c.l.b16 %v555
      %v592 = vunpack.c.l.b16 %v556
      %v593 = vunpack.c.l.b16 %v557
      %v594 = vunpack.c.l.b16 %v558
      %v595 = vunpack.c.l.b16 %v559
      %v596 = vunpack.c.l.b16 %v560
      %v597 = vunpack.c.l.b16 %v561
      %v598 = vunpack.c.l.b16 %v562
      %v599 = vunpack.c.l.b16 %v563
      %v600 = vpack.c.b16 %v585, %v584
      %v601 = vpack.c.b16 %v587, %v586
      %v602 = vpack.c.b16 %v589, %v588
      %v603 = vpack.c.b16 %v591, %v590
      %v604 = vpack.c.b16 %v593, %v592
      %v605 = vpack.c.b16 %v595, %v594
      %v606 = vpack.c.b16 %v597, %v596
      %v607 = vpack.c.b16 %v599, %v598
      %616 = vmatpush.bf16.msra.mxu0 %v607
      %617 = vmatpush.bf16.msra.mxu0 %v606
      %618 = vmatpush.bf16.msra.mxu0 %v605
      %619 = vmatpush.bf16.msra.mxu0 %v604
      %620 = vmatpush.bf16.msra.mxu0 %v603
      %621 = vmatpush.bf16.msra.mxu0 %v602
      %622 = vmatpush.bf16.msra.mxu0 %v601
      %623 = vmatpush.bf16.msra.mxu0 %v600
      %624 = vmatmul.bf16.gmra.mxu0 %v544
      %v625 = vpop.f32.mrf.mxu0
      %v626 = vadd.f32 %v566, %v625
      %v627 = vpop.f32.mrf.mxu0
      %v628 = vadd.f32 %v566, %v627
      %629 = vmatmul.bf16.gmra.mxu0 %v545
      %v630 = vpop.f32.mrf.mxu0
      %v631 = vadd.f32 %v566, %v630
      %v632 = vpop.f32.mrf.mxu0
      %v633 = vadd.f32 %v566, %v632
      %634 = vmatmul.bf16.gmra.mxu0 %v546
      %v635 = vpop.f32.mrf.mxu0
      %v636 = vadd.f32 %v566, %v635
      %v637 = vpop.f32.mrf.mxu0
      %v638 = vadd.f32 %v566, %v637
      %639 = vmatmul.bf16.gmra.mxu0 %v547
      %v640 = vpop.f32.mrf.mxu0
      %v641 = vadd.f32 %v566, %v640
      %v642 = vpop.f32.mrf.mxu0
      %v643 = vadd.f32 %v566, %v642
      %644 = vdwg.mxu0
      %v645 = vmax.f32 %v626, 0.0
      %v646 = vmax.f32 %v628, 0.0
      %v647 = vmax.f32 %v631, 0.0
      %v648 = vmax.f32 %v633, 0.0
      %v649 = vmax.f32 %v636, 0.0
      %v650 = vmax.f32 %v638, 0.0
      %v651 = vmax.f32 %v641, 0.0
      %v652 = vmax.f32 %v643, 0.0
      %v653 = vpack.c.bf16 %v646, %v645
      %v654 = vpack.c.bf16 %v648, %v647
      %v655 = vpack.c.bf16 %v650, %v649
      %v656 = vpack.c.bf16 %v652, %v651
      %v657 = vld [vmem:[%s7] sm:$0xf]
      %v658 = vld [vmem:[%s7 + $0x4] sm:$0xf]
      %v659 = vld [vmem:[%s7 + $0x8] sm:$0xf]
      %v660 = vld [vmem:[%s7 + $0xc] sm:$0xf]
      %v661 = vld [vmem:[%s7 + $0x10] sm:$0xf]
      %v662 = vld [vmem:[%s7 + $0x14] sm:$0xf]
      %v663 = vld [vmem:[%s7 + $0x18] sm:$0xf]
      %v664 = vld [vmem:[%s7 + $0x1c] sm:$0xf]
      %v665 = vld [vmem:[%s7 + $0x20] sm:$0xf]
      %v666 = vld [vmem:[%s7 + $0x24] sm:$0xf]
      %v667 = vld [vmem:[%s7 + $0x28] sm:$0xf]
      %v668 = vld [vmem:[%s7 + $0x2c] sm:$0xf]
      %v669 = vld [vmem:[%s7 + $0x30] sm:$0xf]
      %v670 = vld [vmem:[%s7 + $0x34] sm:$0xf]
      %v671 = vld [vmem:[%s7 + $0x38] sm:$0xf]
      %v672 = vld [vmem:[%s7 + $0x3c] sm:$0xf]
      %v673 = vld [vmem:[%s8] sm:$0x1]
      %v675 = vperm.slane %v673, 0
      %v693 = vunpack.c.l.b16 %v657
      %v694 = vunpack.c.l.b16 %v658
      %v695 = vunpack.c.l.b16 %v659
      %v696 = vunpack.c.l.b16 %v660
      %v697 = vunpack.c.l.b16 %v661
      %v698 = vunpack.c.l.b16 %v662
      %v699 = vunpack.c.l.b16 %v663
      %v700 = vunpack.c.l.b16 %v664
      %v701 = vunpack.c.l.b16 %v665
      %v702 = vunpack.c.l.b16 %v666
      %v703 = vunpack.c.l.b16 %v667
      %v704 = vunpack.c.l.b16 %v668
      %v705 = vunpack.c.l.b16 %v669
      %v706 = vunpack.c.l.b16 %v670
      %v707 = vunpack.c.l.b16 %v671
      %v708 = vunpack.c.l.b16 %v672
      %v709 = vpack.c.b16 %v694, %v693
      %v710 = vpack.c.b16 %v696, %v695
      %v711 = vpack.c.b16 %v698, %v697
      %v712 = vpack.c.b16 %v700, %v699
      %v713 = vpack.c.b16 %v702, %v701
      %v714 = vpack.c.b16 %v704, %v703
      %v715 = vpack.c.b16 %v706, %v705
      %v716 = vpack.c.b16 %v708, %v707
      %725 = vmatpush.bf16.msra.mxu0 %v716
      %726 = vmatpush.bf16.msra.mxu0 %v715
      %727 = vmatpush.bf16.msra.mxu0 %v714
      %728 = vmatpush.bf16.msra.mxu0 %v713
      %729 = vmatpush.bf16.msra.mxu0 %v712
      %730 = vmatpush.bf16.msra.mxu0 %v711
      %731 = vmatpush.bf16.msra.mxu0 %v710
      %732 = vmatpush.bf16.msra.mxu0 %v709
      %733 = vmatmul.bf16.gmra.mxu0 %v653
      %v734 = vpop.f32.mrf.mxu0
      %v735 = vadd.f32 %v675, %v734
      %v736 = vpop.f32.mrf.mxu0
      %v737 = vadd.f32 %v675, %v736
      %738 = vmatmul.bf16.gmra.mxu0 %v654
      %v739 = vpop.f32.mrf.mxu0
      %v740 = vadd.f32 %v675, %v739
      %v741 = vpop.f32.mrf.mxu0
      %v742 = vadd.f32 %v675, %v741
      %743 = vmatmul.bf16.gmra.mxu0 %v655
      %v744 = vpop.f32.mrf.mxu0
      %v745 = vadd.f32 %v675, %v744
      %v746 = vpop.f32.mrf.mxu0
      %v747 = vadd.f32 %v675, %v746
      %748 = vmatmul.bf16.gmra.mxu0 %v656
      %v749 = vpop.f32.mrf.mxu0
      %v750 = vadd.f32 %v675, %v749
      %v751 = vpop.f32.mrf.mxu0
      %v752 = vadd.f32 %v675, %v751
      %753 = vdwg.mxu0
      %v754 = vxor.u32 %v735, 2147483648
      %v755 = vxor.u32 %v737, 2147483648
      %v756 = vxor.u32 %v740, 2147483648
      %v757 = vxor.u32 %v742, 2147483648
      %v758 = vxor.u32 %v745, 2147483648
      %v759 = vxor.u32 %v747, 2147483648
      %v760 = vxor.u32 %v750, 2147483648
      %v761 = vxor.u32 %v752, 2147483648
      %v762 = vmul.f32 %v754, 1.442695
      %v763 = vpow.pop %v762
      %v764 = vmul.f32 %v755, 1.442695
      %v765 = vpow.pop %v764
      %v766 = vmul.f32 %v756, 1.442695
      %v767 = vpow.pop %v766
      %v768 = vmul.f32 %v757, 1.442695
      %v769 = vpow.pop %v768
      %v770 = vmul.f32 %v758, 1.442695
      %v771 = vpow.pop %v770
      %v772 = vmul.f32 %v759, 1.442695
      %v773 = vpow.pop %v772
      %v774 = vmul.f32 %v760, 1.442695
      %v775 = vpow.pop %v774
      %v776 = vmul.f32 %v761, 1.442695
      %v777 = vpow.pop %v776
      %v778 = vadd.f32 %v763, 1.0
      %v779 = vadd.f32 %v765, 1.0
      %v780 = vadd.f32 %v767, 1.0
      %v781 = vadd.f32 %v769, 1.0
      %v782 = vadd.f32 %v771, 1.0
      %v783 = vadd.f32 %v773, 1.0
      %v784 = vadd.f32 %v775, 1.0
      %v785 = vadd.f32 %v777, 1.0
      %v786 = vrcp.pop %v778
      %v787 = vmul.f32 %v778, %v786
      %v788 = vsub.f32 1.0, %v787
      %v789 = vmul.f32 %v786, %v788
      %v790 = vadd.f32 %v786, %v789
      %vm791 = vweird.f32 %v778
      %vm792 = vweird.f32 %v786
      %vm793 = vmor %vm791, %vm792
      %v794 = vsel %vm793, %v786, %v790
      %v795 = vand.u32 2147483647, %v778
      %vm796 = vcmp.eq.f32.partialorder %v795, 8.507059e+37
      %v797 = vand.u32 %v778, 2147483648
      %v798 = vor.u32 1.1754944e-38, %v797
      %v799 = vsel %vm796, %v798, %v794
      %v800 = vmul.f32 1.0, %v799
      %v801 = vrcp.pop %v779
      %v802 = vmul.f32 %v779, %v801
      %v803 = vsub.f32 1.0, %v802
      %v804 = vmul.f32 %v801, %v803
      %v805 = vadd.f32 %v801, %v804
      %vm806 = vweird.f32 %v779
      %vm807 = vweird.f32 %v801
      %vm808 = vmor %vm806, %vm807
      %v809 = vsel %vm808, %v801, %v805
      %v810 = vand.u32 2147483647, %v779
      %vm811 = vcmp.eq.f32.partialorder %v810, 8.507059e+37
      %v812 = vand.u32 %v779, 2147483648
      %v813 = vor.u32 1.1754944e-38, %v812
      %v814 = vsel %vm811, %v813, %v809
      %v815 = vmul.f32 1.0, %v814
      %v816 = vrcp.pop %v780
      %v817 = vmul.f32 %v780, %v816
      %v818 = vsub.f32 1.0, %v817
      %v819 = vmul.f32 %v816, %v818
      %v820 = vadd.f32 %v816, %v819
      %vm821 = vweird.f32 %v780
      %vm822 = vweird.f32 %v816
      %vm823 = vmor %vm821, %vm822
      %v824 = vsel %vm823, %v816, %v820
      %v825 = vand.u32 2147483647, %v780
      %vm826 = vcmp.eq.f32.partialorder %v825, 8.507059e+37
      %v827 = vand.u32 %v780, 2147483648
      %v828 = vor.u32 1.1754944e-38, %v827
      %v829 = vsel %vm826, %v828, %v824
      %v830 = vmul.f32 1.0, %v829
      %v831 = vrcp.pop %v781
      %v832 = vmul.f32 %v781, %v831
      %v833 = vsub.f32 1.0, %v832
      %v834 = vmul.f32 %v831, %v833
      %v835 = vadd.f32 %v831, %v834
      %vm836 = vweird.f32 %v781
      %vm837 = vweird.f32 %v831
      %vm838 = vmor %vm836, %vm837
      %v839 = vsel %vm838, %v831, %v835
      %v840 = vand.u32 2147483647, %v781
      %vm841 = vcmp.eq.f32.partialorder %v840, 8.507059e+37
      %v842 = vand.u32 %v781, 2147483648
      %v843 = vor.u32 1.1754944e-38, %v842
      %v844 = vsel %vm841, %v843, %v839
      %v845 = vmul.f32 1.0, %v844
      %v846 = vrcp.pop %v782
      %v847 = vmul.f32 %v782, %v846
      %v848 = vsub.f32 1.0, %v847
      %v849 = vmul.f32 %v846, %v848
      %v850 = vadd.f32 %v846, %v849
      %vm851 = vweird.f32 %v782
      %vm852 = vweird.f32 %v846
      %vm853 = vmor %vm851, %vm852
      %v854 = vsel %vm853, %v846, %v850
      %v855 = vand.u32 2147483647, %v782
      %vm856 = vcmp.eq.f32.partialorder %v855, 8.507059e+37
      %v857 = vand.u32 %v782, 2147483648
      %v858 = vor.u32 1.1754944e-38, %v857
      %v859 = vsel %vm856, %v858, %v854
      %v860 = vmul.f32 1.0, %v859
      %v861 = vrcp.pop %v783
      %v862 = vmul.f32 %v783, %v861
      %v863 = vsub.f32 1.0, %v862
      %v864 = vmul.f32 %v861, %v863
      %v865 = vadd.f32 %v861, %v864
      %vm866 = vweird.f32 %v783
      %vm867 = vweird.f32 %v861
      %vm868 = vmor %vm866, %vm867
      %v869 = vsel %vm868, %v861, %v865
      %v870 = vand.u32 2147483647, %v783
      %vm871 = vcmp.eq.f32.partialorder %v870, 8.507059e+37
      %v872 = vand.u32 %v783, 2147483648
      %v873 = vor.u32 1.1754944e-38, %v872
      %v874 = vsel %vm871, %v873, %v869
      %v875 = vmul.f32 1.0, %v874
      %v876 = vrcp.pop %v784
      %v877 = vmul.f32 %v784, %v876
      %v878 = vsub.f32 1.0, %v877
      %v879 = vmul.f32 %v876, %v878
      %v880 = vadd.f32 %v876, %v879
      %vm881 = vweird.f32 %v784
      %vm882 = vweird.f32 %v876
      %vm883 = vmor %vm881, %vm882
      %v884 = vsel %vm883, %v876, %v880
      %v885 = vand.u32 2147483647, %v784
      %vm886 = vcmp.eq.f32.partialorder %v885, 8.507059e+37
      %v887 = vand.u32 %v784, 2147483648
      %v888 = vor.u32 1.1754944e-38, %v887
      %v889 = vsel %vm886, %v888, %v884
      %v890 = vmul.f32 1.0, %v889
      %v891 = vrcp.pop %v785
      %v892 = vmul.f32 %v785, %v891
      %v893 = vsub.f32 1.0, %v892
      %v894 = vmul.f32 %v891, %v893
      %v895 = vadd.f32 %v891, %v894
      %vm896 = vweird.f32 %v785
      %vm897 = vweird.f32 %v891
      %vm898 = vmor %vm896, %vm897
      %v899 = vsel %vm898, %v891, %v895
      %v900 = vand.u32 2147483647, %v785
      %vm901 = vcmp.eq.f32.partialorder %v900, 8.507059e+37
      %v902 = vand.u32 %v785, 2147483648
      %v903 = vor.u32 1.1754944e-38, %v902
      %v904 = vsel %vm901, %v903, %v899
      %v905 = vmul.f32 1.0, %v904
      %v906 = vpack.c.bf16 %v800, %v800
      %v907 = vpack.c.bf16 %v815, %v815
      %v908 = vpack.c.bf16 %v830, %v830
      %v909 = vpack.c.bf16 %v845, %v845
      %v910 = vpack.c.bf16 %v860, %v860
      %v911 = vpack.c.bf16 %v875, %v875
      %v912 = vpack.c.bf16 %v890, %v890
      %v913 = vpack.c.bf16 %v905, %v905
      %vm914 = vcmask 519168
      %915 = vst.msk [vmem:[%s334] sm:$0xf] %vm914, %v906
      %916 = vst.msk [vmem:[%s334 + $0x4] sm:$0xf] %vm914, %v907
      %917 = vst.msk [vmem:[%s334 + $0x8] sm:$0xf] %vm914, %v908
      %918 = vst.msk [vmem:[%s334 + $0xc] sm:$0xf] %vm914, %v909
      %919 = vst.msk [vmem:[%s334 + $0x10] sm:$0xf] %vm914, %v910
      %920 = vst.msk [vmem:[%s334 + $0x14] sm:$0xf] %vm914, %v911
      %921 = vst.msk [vmem:[%s334 + $0x18] sm:$0xf] %vm914, %v912
      %922 = vst.msk [vmem:[%s334 + $0x1c] sm:$0xf] %vm914, %v913
      %s923 = smul.u32 8, %s20
      %p924 = scmp.lt.s32.totalorder %s923, 15
      %s925 = scalar_select %p924, %s923, 15
      %s926 = smul.addr %s925, 4
      %s927 = scalar_lea.vmem %s9, %s926
      // Predicated region
      $region57: #{fcn_ae_forward.1} parent=55 // pred_check
        %p928 = pneg %p232
      $region58: #{fcn_ae_forward.1} parent=55 // pred_check_branch
        %930 = sbr.rel (%p928) target = $region60
      $region59: #{fcn_ae_forward.1} parent=55 // pred_region
        %s931 = smul.u32 8, %s20
      $region60: #{fcn_ae_forward.1} parent=55 // pred_fallthru
        _
    $region56: #{fcn_ae_forward.1} parent=5 // pred_fallthru
      _
    %p932 = scmp.le.s32.totalorder 2, %s15
    // Predicated region
    $region61: #{fcn_ae_forward.1} parent=5 // pred_check
      %p933 = pneg %p932
    $region62: #{fcn_ae_forward.1} parent=5 // pred_check_branch
      %935 = sbr.rel (%p933) target = $region64
    $region63: #{fcn_ae_forward.1} parent=5 // pred_region
      %s936 = ssub.s32 %s15, 2
      // Predicated region
      $region65: #{fcn_ae_forward.1} parent=63 // pred_check
        %p937 = pneg %p238
      $region66: #{fcn_ae_forward.1} parent=63 // pred_check_branch
        %939 = sbr.rel (%p937) target = $region68
      $region67: #{fcn_ae_forward.1} parent=63 // pred_region
        %s940 = smul.u32 8, %s21
        %p941 = scmp.lt.s32.totalorder %s940, 15
        %s942 = scalar_select %p941, %s940, 15
        %s943 = smul.addr %s942, 4
        %s944 = scalar_lea.vmem %s9, %s943
      $region68: #{fcn_ae_forward.1} parent=63 // pred_fallthru
        _
    $region64: #{fcn_ae_forward.1} parent=5 // pred_fallthru
      _
  $region6: #{fcn_ae_forward.1} parent=0 // loop_footer
    %s19 = sadd.s32 1, %s15
  $region7: #{fcn_ae_forward.1} parent=0 // loop_footer_branch
    %14 = sbr.rel target = $region3
  $region8: #{fcn_ae_forward.1} parent=0 // loop_exit
    _

</llo_original>
